<compile_context>
chip_gen: v5e
topology: v5e:2x2
jax: 0.10.0
libtpu: 0.0.40
codegen_flags: <defaults>
</compile_context>

<pallas_src>
import math

import jax
import jax.numpy as jnp
from jax.experimental import pallas as pl
from jax.experimental.pallas import tpu as pltpu


def _state_critic_kernel(x_ref, rtT_ref, wf_ref, bf_ref, w2_ref, b2_ref,
                         w3r_ref, bsum_ref, o_ref):
    # x_ref:   (rows, C)   rows = bb batch elements x L positions, channels-last.
    # rtT_ref: (bb, rows)  one-hot: rtT[j, r] = 1 iff row r belongs to local batch j.
    x = x_ref[...]
    # Fused fc1 (both pointwise-conv encoders folded into the weights) + ReLU.
    h1 = jnp.maximum(
        jnp.dot(x, wf_ref[...], preferred_element_type=jnp.float32)
        + bf_ref[...], 0.0)                                            # (rows, 20)
    # fc2 + ReLU.
    h2 = jnp.maximum(
        jnp.dot(h1, w2_ref[...], preferred_element_type=jnp.float32)
        + b2_ref[...], 0.0)                                            # (rows, 20)
    # Per-batch sum over the L sequence positions on the (otherwise idle) MXU:
    # seg[j, c] = sum over rows r of batch j of h2[r, c].
    seg = jnp.dot(rtT_ref[...], h2, preferred_element_type=jnp.float32)  # (bb, 20)
    # fc3 collapses to a VPU mul + tiny lane reduce; its bias becomes + L*b3.
    q = jnp.sum(seg * w3r_ref[...], axis=-1, keepdims=True)             # (bb, 1)
    o_ref[0] = q + bsum_ref[...]                                        # (bb, 1)


def fold_params(params):
    """Fold the two linear encoders into fc1 and pre-shape fc3. Do this once
    per parameter update (training), not once per forward call."""
    ws, bs, wd, bd, w1, b1, w2, b2, w3, b3 = params
    H = ws.shape[1]
    w1s, w1d = w1[:H], w1[H:]
    wf = jnp.concatenate([ws @ w1s, wd @ w1d], axis=0)     # (S+D, 20)
    bf = bs @ w1s + bd @ w1d + b1                          # (1, 20)
    w3r = w3.reshape(1, -1)                                # (1, 20)
    return wf, bf, w2, b2, w3r, b3


def _tile_batches(B, L, target_rows=2048, max_bb=256):
    """bb whole batch elements per grid step; bb*L rows, multiple of 8."""
    bb = max(1, min(B, target_rows // max(L, 1), max_bb))
    align = 8 // math.gcd(L, 8)          # makes bb*L a multiple of 8
    bb = ((bb + align - 1) // align) * align
    b_pad = ((B + bb - 1) // bb) * bb
    return bb, b_pad


def state_critic_forward(static, dynamic, folded_params):
    """static: (B, static_size, L), dynamic: (B, dynamic_size, L) (PyTorch NCL).
    Returns (B, 1), matching StateCritic.forward."""
    wf, bf, w2, b2, w3r, b3 = folded_params
    B, S, L = static.shape
    D = dynamic.shape[1]
    C = S + D

    # Channel concat in the native NCL layout, then a single transpose to
    # channels-last rows (tiny C; one cheap XLA pass).
    x = jnp.concatenate([static, dynamic], axis=1).astype(jnp.float32)  # (B, C, L)
    x = jnp.transpose(x, (0, 2, 1))                                     # (B, L, C)

    bb, b_pad = _tile_batches(B, L)
    rows = bb * L
    num_steps = b_pad // bb
    # TODO(synk): for very long sequences (rows*512B*2 buffers approaching the
    # scoped-VMEM limit) split L across grid steps with a carried accumulator.

    if b_pad != B:
        x = jnp.pad(x, ((0, b_pad - B), (0, 0), (0, 0)))
    x = x.reshape(b_pad * L, C)

    # One-hot segment matrix (fetched once, resident): row r -> local batch j.
    row_batch = jnp.arange(rows, dtype=jnp.int32) // L
    rtT = (row_batch[None, :]
           == jnp.arange(bb, dtype=jnp.int32)[:, None]).astype(jnp.float32)

    bsum = jnp.float32(L) * b3                                          # (1, 1)

    def const_spec(a):
        nd = a.ndim
        return pl.BlockSpec(a.shape, lambda i, _nd=nd: (0,) * _nd)

    out = pl.pallas_call(
        _state_critic_kernel,
        out_shape=jax.ShapeDtypeStruct((num_steps, bb, 1), jnp.float32),
        grid=(num_steps,),
        in_specs=[
            pl.BlockSpec((rows, C), lambda i: (i, 0)),
            const_spec(rtT),
            const_spec(wf), const_spec(bf),
            const_spec(w2), const_spec(b2),
            const_spec(w3r), const_spec(bsum),
        ],
        out_specs=pl.BlockSpec((1, bb, 1), lambda i: (i, 0, 0)),
        compiler_params=pltpu.CompilerParams(
            dimension_semantics=("parallel",)),
    )(x, rtT, wf, bf, w2, b2, w3r, bsum)

    return out.reshape(b_pad, 1)[:B]


def _xavier_uniform(key, in_c, out_c):
    # Matches nn.init.xavier_uniform_ for a (out_c, in_c, 1) Conv1d weight,
    # stored transposed as (in_c, out_c).
    bound = (6.0 / (in_c + out_c)) ** 0.5
    return jax.random.uniform(key, (in_c, out_c), jnp.float32, -bound, bound)


def init_params(key, static_size, dynamic_size, hidden_size):
    ks = jax.random.split(key, 10)
    ws = _xavier_uniform(ks[0], static_size, hidden_size)
    bs = jax.random.uniform(ks[1], (1, hidden_size), jnp.float32, -0.1, 0.1)
    wd = _xavier_uniform(ks[2], dynamic_size, hidden_size)
    bd = jax.random.uniform(ks[3], (1, hidden_size), jnp.float32, -0.1, 0.1)
    w1 = _xavier_uniform(ks[4], hidden_size * 2, 20)
    b1 = jax.random.uniform(ks[5], (1, 20), jnp.float32, -0.1, 0.1)
    w2 = _xavier_uniform(ks[6], 20, 20)
    b2 = jax.random.uniform(ks[7], (1, 20), jnp.float32, -0.1, 0.1)
    w3 = _xavier_uniform(ks[8], 20, 1)
    b3 = jax.random.uniform(ks[9], (1, 1), jnp.float32, -0.1, 0.1)
    return (ws, bs, wd, bd, w1, b1, w2, b2, w3, b3)


def reference_forward(static, dynamic, params):
    """Pure-JAX reference mirroring the PyTorch forward exactly."""
    ws, bs, wd, bd, w1, b1, w2, b2, w3, b3 = params
    s = jnp.transpose(static, (0, 2, 1))
    d = jnp.transpose(dynamic, (0, 2, 1))
    sh = s @ ws + bs
    dh = d @ wd + bd
    hidden = jnp.concatenate([sh, dh], axis=-1)
    h1 = jax.nn.relu(hidden @ w1 + b1)
    h2 = jax.nn.relu(h1 @ w2 + b2)
    h3 = h2 @ w3 + b3            # (B, L, 1)
    return jnp.sum(h3, axis=1)   # (B, 1) == fc3(...).sum(dim=2)


if __name__ == "__main__":
    B, static_size, dynamic_size, hidden_size, L = 2, 4, 4, 32, 16

    key = jax.random.PRNGKey(0)
    k_s, k_d, k_p = jax.random.split(key, 3)
    static = jax.random.normal(k_s, (B, static_size, L), jnp.float32)
    dynamic = jax.random.normal(k_d, (B, dynamic_size, L), jnp.float32)
    params = init_params(k_p, static_size, dynamic_size, hidden_size)
    folded = fold_params(params)   # hoisted out of the per-call path

    out = state_critic_forward(static, dynamic, folded)
    out = jax.block_until_ready(out)

    ref = reference_forward(static, dynamic, params)
    assert out.shape == (B, 1), out.shape
    assert jnp.allclose(out, ref, atol=1e-4, rtol=1e-4), (out, ref)

    print("KERNEL_OK")
</pallas_src>

<mosaic_0001>
module attributes {stable_mosaic.version = 11 : i64} {
  func.func @_state_critic_kernel(%arg0: i32, %arg1: memref<32x8xf32, #tpu.memory_space<vmem>>, %arg2: memref<2x32xf32, #tpu.memory_space<vmem>>, %arg3: memref<8x20xf32, #tpu.memory_space<vmem>>, %arg4: memref<1x20xf32, #tpu.memory_space<vmem>>, %arg5: memref<20x20xf32, #tpu.memory_space<vmem>>, %arg6: memref<1x20xf32, #tpu.memory_space<vmem>>, %arg7: memref<1x20xf32, #tpu.memory_space<vmem>>, %arg8: memref<1x1xf32, #tpu.memory_space<vmem>>, %arg9: memref<1x2x1xf32, #tpu.memory_space<vmem>>) attributes {dimension_semantics = [#tpu.dimension_semantics<parallel>], iteration_bounds = array<i64: 1>, scalar_prefetch = 0 : i64, scratch_operands = 0 : i64, tpu.core_type = #tpu.core_type<tc>, window_params = [{transform_indices = @transform_0, window_bounds = array<i64: 32, 8>}, {pipeline_mode = #tpu.pipeline_mode<synchronous>, transform_indices = @transform_1, window_bounds = array<i64: 2, 32>}, {pipeline_mode = #tpu.pipeline_mode<synchronous>, transform_indices = @transform_2, window_bounds = array<i64: 8, 20>}, {pipeline_mode = #tpu.pipeline_mode<synchronous>, transform_indices = @transform_3, window_bounds = array<i64: 1, 20>}, {pipeline_mode = #tpu.pipeline_mode<synchronous>, transform_indices = @transform_4, window_bounds = array<i64: 20, 20>}, {pipeline_mode = #tpu.pipeline_mode<synchronous>, transform_indices = @transform_5, window_bounds = array<i64: 1, 20>}, {pipeline_mode = #tpu.pipeline_mode<synchronous>, transform_indices = @transform_6, window_bounds = array<i64: 1, 20>}, {pipeline_mode = #tpu.pipeline_mode<synchronous>, transform_indices = @transform_7, window_bounds = array<i64: 1, 1>}, {transform_indices = @transform_8, window_bounds = array<i64: 1, 2, 1>}]} {
    %c0 = arith.constant 0 : index
    %c0_0 = arith.constant 0 : index
    %0 = vector.load %arg1[%c0, %c0_0] : memref<32x8xf32, #tpu.memory_space<vmem>>, vector<32x8xf32>
    %c0_1 = arith.constant 0 : index
    %c0_2 = arith.constant 0 : index
    %1 = vector.load %arg3[%c0_1, %c0_2] : memref<8x20xf32, #tpu.memory_space<vmem>>, vector<8x20xf32>
    %cst = arith.constant dense<0.000000e+00> : vector<32x20xf32>
    %2 = tpu.matmul %0, %1, %cst {dimension_numbers = #tpu.dot_dimension_numbers<[1], [0], [0], [1], [0, 0, 1, 1], [], []>} : vector<32x8xf32>, vector<8x20xf32>, vector<32x20xf32> -> vector<32x20xf32>
    %c0_3 = arith.constant 0 : index
    %c0_4 = arith.constant 0 : index
    %3 = vector.load %arg4[%c0_3, %c0_4] : memref<1x20xf32, #tpu.memory_space<vmem>>, vector<1x20xf32>
    %4 = vector.broadcast %3 : vector<1x20xf32> to vector<32x20xf32>
    %5 = arith.addf %2, %4 : vector<32x20xf32>
    %cst_5 = arith.constant 0.000000e+00 : f32
    %6 = vector.broadcast %cst_5 : f32 to vector<32x20xf32>
    %7 = arith.maximumf %5, %6 : vector<32x20xf32>
    %c0_6 = arith.constant 0 : index
    %c0_7 = arith.constant 0 : index
    %8 = vector.load %arg5[%c0_6, %c0_7] : memref<20x20xf32, #tpu.memory_space<vmem>>, vector<20x20xf32>
    %cst_8 = arith.constant dense<0.000000e+00> : vector<32x20xf32>
    %9 = tpu.matmul %7, %8, %cst_8 {dimension_numbers = #tpu.dot_dimension_numbers<[1], [0], [0], [1], [0, 0, 1, 1], [], []>} : vector<32x20xf32>, vector<20x20xf32>, vector<32x20xf32> -> vector<32x20xf32>
    %c0_9 = arith.constant 0 : index
    %c0_10 = arith.constant 0 : index
    %10 = vector.load %arg6[%c0_9, %c0_10] : memref<1x20xf32, #tpu.memory_space<vmem>>, vector<1x20xf32>
    %11 = vector.broadcast %10 : vector<1x20xf32> to vector<32x20xf32>
    %12 = arith.addf %9, %11 : vector<32x20xf32>
    %cst_11 = arith.constant 0.000000e+00 : f32
    %13 = vector.broadcast %cst_11 : f32 to vector<32x20xf32>
    %14 = arith.maximumf %12, %13 : vector<32x20xf32>
    %c0_12 = arith.constant 0 : index
    %c0_13 = arith.constant 0 : index
    %15 = vector.load %arg2[%c0_12, %c0_13] : memref<2x32xf32, #tpu.memory_space<vmem>>, vector<2x32xf32>
    %cst_14 = arith.constant dense<0.000000e+00> : vector<2x20xf32>
    %16 = tpu.matmul %15, %14, %cst_14 {dimension_numbers = #tpu.dot_dimension_numbers<[1], [0], [0], [1], [0, 0, 1, 1], [], []>} : vector<2x32xf32>, vector<32x20xf32>, vector<2x20xf32> -> vector<2x20xf32>
    %c0_15 = arith.constant 0 : index
    %c0_16 = arith.constant 0 : index
    %17 = vector.load %arg7[%c0_15, %c0_16] : memref<1x20xf32, #tpu.memory_space<vmem>>, vector<1x20xf32>
    %18 = vector.broadcast %17 : vector<1x20xf32> to vector<2x20xf32>
    %19 = arith.mulf %16, %18 : vector<2x20xf32>
    %cst_17 = arith.constant dense<0.000000e+00> : vector<2xf32>
    %20 = vector.multi_reduction <add>, %19, %cst_17 [1] : vector<2x20xf32> to vector<2xf32>
    %21 = vector.shape_cast %20 : vector<2xf32> to vector<2x1xf32>
    %c0_18 = arith.constant 0 : index
    %c0_19 = arith.constant 0 : index
    %22 = vector.load %arg8[%c0_18, %c0_19] : memref<1x1xf32, #tpu.memory_space<vmem>>, vector<1x1xf32>
    %23 = vector.broadcast %22 : vector<1x1xf32> to vector<2x1xf32>
    %24 = arith.addf %21, %23 : vector<2x1xf32>
    %c0_20 = arith.constant 0 : index
    %c0_21 = arith.constant 0 : index
    %c0_22 = arith.constant 0 : index
    %25 = vector.load %arg9[%c0_20, %c0_21, %c0_22] : memref<1x2x1xf32, #tpu.memory_space<vmem>>, vector<1x2x1xf32>
    %26 = vector.shape_cast %25 : vector<1x2x1xf32> to vector<2x1xf32>
    %27 = vector.shape_cast %24 : vector<2x1xf32> to vector<1x2x1xf32>
    tpu.vector_store %arg9[%c0_20, %c0_21, %c0_22], %27 {strides = array<i32>} : memref<1x2x1xf32, #tpu.memory_space<vmem>>, vector<1x2x1xf32>,
    return
  }
  func.func @transform_0(%arg0: i32) -> (i32, i32) {
    %c0_i32 = arith.constant 0 : i32
    %c0_i32_0 = arith.constant 0 : i32
    return %arg0, %c0_i32 : i32, i32
  }
  func.func @transform_1(%arg0: i32) -> (i32, i32) {
    %c0_i32 = arith.constant 0 : i32
    %c0_i32_0 = arith.constant 0 : i32
    %c0_i32_1 = arith.constant 0 : i32
    return %c0_i32, %c0_i32_0 : i32, i32
  }
  func.func @transform_2(%arg0: i32) -> (i32, i32) {
    %c0_i32 = arith.constant 0 : i32
    %c0_i32_0 = arith.constant 0 : i32
    %c0_i32_1 = arith.constant 0 : i32
    return %c0_i32, %c0_i32_0 : i32, i32
  }
  func.func @transform_3(%arg0: i32) -> (i32, i32) {
    %c0_i32 = arith.constant 0 : i32
    %c0_i32_0 = arith.constant 0 : i32
    %c0_i32_1 = arith.constant 0 : i32
    return %c0_i32, %c0_i32_0 : i32, i32
  }
  func.func @transform_4(%arg0: i32) -> (i32, i32) {
    %c0_i32 = arith.constant 0 : i32
    %c0_i32_0 = arith.constant 0 : i32
    %c0_i32_1 = arith.constant 0 : i32
    return %c0_i32, %c0_i32_0 : i32, i32
  }
  func.func @transform_5(%arg0: i32) -> (i32, i32) {
    %c0_i32 = arith.constant 0 : i32
    %c0_i32_0 = arith.constant 0 : i32
    %c0_i32_1 = arith.constant 0 : i32
    return %c0_i32, %c0_i32_0 : i32, i32
  }
  func.func @transform_6(%arg0: i32) -> (i32, i32) {
    %c0_i32 = arith.constant 0 : i32
    %c0_i32_0 = arith.constant 0 : i32
    %c0_i32_1 = arith.constant 0 : i32
    return %c0_i32, %c0_i32_0 : i32, i32
  }
  func.func @transform_7(%arg0: i32) -> (i32, i32) {
    %c0_i32 = arith.constant 0 : i32
    %c0_i32_0 = arith.constant 0 : i32
    %c0_i32_1 = arith.constant 0 : i32
    return %c0_i32, %c0_i32_0 : i32, i32
  }
  func.func @transform_8(%arg0: i32) -> (i32, i32, i32) {
    %c0_i32 = arith.constant 0 : i32
    %c0_i32_0 = arith.constant 0 : i32
    %c0_i32_1 = arith.constant 0 : i32
    return %arg0, %c0_i32, %c0_i32_0 : i32, i32, i32
  }
}

</mosaic_0001>

<llo_original>
// kernel: tpu_custom_call.1
$region0: #{tpu_custom_call.1}
  #allocation0 [shape = 'u32[]', space=smem, size = 0x4, offset = 0x4, fixed_abs, tag = 'smem constant byte address 0x4 - core index']
  #allocation1 [shape = 'u32[72,128]{1,0:T(1,128)}', space=vmem, size = 0x9000, scoped, tag = 'internal scratch']
  #allocation2 [shape = 'f32[1,1]{1,0:T(1,128)S(1)}', space=vmem, size = 0x200, scoped, tag = 'scoped memory for tpu_custom_call.1']
  %s0 = inlined_call_operand.vmem [shape: f32[32,8], index: 0, kind: input, shape index: {}]
  %s1 = inlined_call_operand.vmem [shape: f32[2,32], index: 1, kind: input, shape index: {}]
  %s2 = inlined_call_operand.vmem [shape: f32[8,20], index: 2, kind: input, shape index: {}]
  %s3 = inlined_call_operand.vmem [shape: f32[1,20], index: 3, kind: input, shape index: {}]
  %s4 = inlined_call_operand.vmem [shape: f32[20,20], index: 4, kind: input, shape index: {}]
  %s5 = inlined_call_operand.vmem [shape: f32[1,20], index: 5, kind: input, shape index: {}]
  %s6 = inlined_call_operand.vmem [shape: f32[1,20], index: 6, kind: input, shape index: {}]
  %s7 = inlined_call_operand.<no memory space> [shape: f32[1,1], index: 7, kind: input, shape index: {}]
  %s8 = inlined_call_operand.vmem [shape: f32[1,2,1], index: 8, kind: output, shape index: {}]
  %s9 = sld [smem:[#allocation0]]
  $region42: #{tpu_custom_call.1} parent=0
    _
  %s11 = ssub.s32 1, %s9
  %s12 = scalar_select 0, %s11, %s9
  %v13 = vstv %s7
  %14 = vst [vmem:[#allocation2] sm:$0x1] %v13
  // Predicated region
  $region2: #{tpu_custom_call.1} parent=0 // pred_check
    _
  $region3: #{tpu_custom_call.1} parent=0 // pred_check_branch
    %16 = sbr.rel (0) target = $region5
  $region4: #{tpu_custom_call.1} parent=0 // pred_region
    _
  $region5: #{tpu_custom_call.1} parent=0 // pred_fallthru
    _
  // Predicated region
  $region6: #{tpu_custom_call.1} parent=0 // pred_check
    _
  $region7: #{tpu_custom_call.1} parent=0 // pred_check_branch
    %18 = sbr.rel (0) target = $region9
  $region8: #{tpu_custom_call.1} parent=0 // pred_region
    _
  $region9: #{tpu_custom_call.1} parent=0 // pred_fallthru
    _
  // Predicated region
  $region10: #{tpu_custom_call.1} parent=0 // pred_check
    _
  $region11: #{tpu_custom_call.1} parent=0 // pred_check_branch
    %20 = sbr.rel (0) target = $region13
  $region12: #{tpu_custom_call.1} parent=0 // pred_region
    _
  $region13: #{tpu_custom_call.1} parent=0 // pred_fallthru
    _
  // Predicated region
  $region14: #{tpu_custom_call.1} parent=0 // pred_check
    _
  $region15: #{tpu_custom_call.1} parent=0 // pred_check_branch
    %22 = sbr.rel (0) target = $region17
  $region16: #{tpu_custom_call.1} parent=0 // pred_region
    _
  $region17: #{tpu_custom_call.1} parent=0 // pred_fallthru
    _
  // Predicated region
  $region18: #{tpu_custom_call.1} parent=0 // pred_check
    _
  $region19: #{tpu_custom_call.1} parent=0 // pred_check_branch
    %24 = sbr.rel (0) target = $region21
  $region20: #{tpu_custom_call.1} parent=0 // pred_region
    _
  $region21: #{tpu_custom_call.1} parent=0 // pred_fallthru
    _
  // Predicated region
  $region22: #{tpu_custom_call.1} parent=0 // pred_check
    _
  $region23: #{tpu_custom_call.1} parent=0 // pred_check_branch
    %26 = sbr.rel (0) target = $region25
  $region24: #{tpu_custom_call.1} parent=0 // pred_region
    _
  $region25: #{tpu_custom_call.1} parent=0 // pred_fallthru
    _
  // Predicated region
  $region26: #{tpu_custom_call.1} parent=0 // pred_check
    _
  $region27: #{tpu_custom_call.1} parent=0 // pred_check_branch
    %28 = sbr.rel (0) target = $region29
  $region28: #{tpu_custom_call.1} parent=0 // pred_region
    _
  $region29: #{tpu_custom_call.1} parent=0 // pred_fallthru
    _
  // Predicated region
  $region30: #{tpu_custom_call.1} parent=0 // pred_check
    _
  $region31: #{tpu_custom_call.1} parent=0 // pred_check_branch
    %30 = sbr.rel (0) target = $region33
  $region32: #{tpu_custom_call.1} parent=0 // pred_region
    _
  $region33: #{tpu_custom_call.1} parent=0 // pred_fallthru
    _
  %v31 = vld [vmem:[%s0] sm:$0xff]
  %v32 = vld [vmem:[%s0 + $0x8] sm:$0xff]
  %v33 = vld [vmem:[%s0 + $0x10] sm:$0xff]
  %v34 = vld [vmem:[%s0 + $0x18] sm:$0xff]
  %v35 = vld [vmem:[%s2] sm:$0xff]
  %v36 = vld [vmem:[%s3] sm:$0x1]
  %v38 = vperm.slane %v36, 0
  %vm40 = vcmask 64512
  %v42 = vsel %vm40, %v31, 0
  %v45 = vsel %vm40, %v32, 0
  %v48 = vsel %vm40, %v33, 0
  %v51 = vsel %vm40, %v34, 0
  %53 = vmatpush.msra.mxu0 0.0
  %54 = vmatpush.msra.mxu0 0.0
  %55 = vmatpush.msra.mxu0 0.0
  %56 = vmatpush.msra.mxu0 0.0
  %57 = vmatpush.msra.mxu0 0.0
  %58 = vmatpush.msra.mxu0 0.0
  %59 = vmatpush.msra.mxu0 0.0
  %60 = vmatpush.msra.mxu0 0.0
  %61 = vmatpush.msra.mxu0 0.0
  %62 = vmatpush.msra.mxu0 0.0
  %63 = vmatpush.msra.mxu0 0.0
  %64 = vmatpush.msra.mxu0 0.0
  %65 = vmatpush.msra.mxu0 0.0
  %66 = vmatpush.msra.mxu0 0.0
  %67 = vmatpush.msra.mxu0 0.0
  %68 = vmatpush.msra.mxu0 %v35
  %69 = vmatmul.f32.gmra.mxu0 %v42
  %v70 = vpop.f32.mrf.mxu0
  %v71 = vadd.f32 %v38, %v70
  %72 = vmatmul.f32.gmra.mxu0 %v45
  %v73 = vpop.f32.mrf.mxu0
  %v74 = vadd.f32 %v38, %v73
  %75 = vmatmul.f32.gmra.mxu0 %v48
  %v76 = vpop.f32.mrf.mxu0
  %v77 = vadd.f32 %v38, %v76
  %78 = vmatmul.f32.gmra.mxu0 %v51
  %v79 = vpop.f32.mrf.mxu0
  %v80 = vadd.f32 %v38, %v79
  %81 = vdwg.mxu0
  %v82 = vmax.f32 %v71, 0.0
  %v83 = vmax.f32 %v74, 0.0
  %v84 = vmax.f32 %v77, 0.0
  %v85 = vmax.f32 %v80, 0.0
  %v86 = vld [vmem:[%s4] sm:$0xff]
  %v87 = vld [vmem:[%s4 + $0x8] sm:$0xff]
  %v88 = vld [vmem:[%s4 + $0x10] sm:$0xf]
  %v89 = vld [vmem:[%s5] sm:$0x1]
  %v91 = vperm.slane %v89, 0
  %vm93 = vcmask 162816
  %v95 = vsel %vm93, %v82, 0
  %v98 = vsel %vm93, %v83, 0
  %v101 = vsel %vm93, %v84, 0
  %v104 = vsel %vm93, %v85, 0
  %vm106 = vcmask 1043456
  %v108 = vsel %vm106, %v88, 0
  %110 = vmatpush.msra.mxu0 0.0
  %111 = vmatpush.msra.mxu0 0.0
  %112 = vmatpush.msra.mxu0 0.0
  %113 = vmatpush.msra.mxu0 0.0
  %114 = vmatpush.msra.mxu0 0.0
  %115 = vmatpush.msra.mxu0 0.0
  %116 = vmatpush.msra.mxu0 0.0
  %117 = vmatpush.msra.mxu0 0.0
  %118 = vmatpush.msra.mxu0 0.0
  %119 = vmatpush.msra.mxu0 0.0
  %120 = vmatpush.msra.mxu0 0.0
  %121 = vmatpush.msra.mxu0 0.0
  %122 = vmatpush.msra.mxu0 0.0
  %123 = vmatpush.msra.mxu0 %v108
  %124 = vmatpush.msra.mxu0 %v87
  %125 = vmatpush.msra.mxu0 %v86
  %126 = vmatmul.f32.gmra.mxu0 %v95
  %v127 = vpop.f32.mrf.mxu0
  %v128 = vadd.f32 %v91, %v127
  %129 = vmatmul.f32.gmra.mxu0 %v98
  %v130 = vpop.f32.mrf.mxu0
  %v131 = vadd.f32 %v91, %v130
  %132 = vmatmul.f32.gmra.mxu0 %v101
  %v133 = vpop.f32.mrf.mxu0
  %v134 = vadd.f32 %v91, %v133
  %135 = vmatmul.f32.gmra.mxu0 %v104
  %v136 = vpop.f32.mrf.mxu0
  %v137 = vadd.f32 %v91, %v136
  %138 = vdwg.mxu0
  %v139 = vmax.f32 %v128, 0.0
  %v140 = vmax.f32 %v131, 0.0
  %v141 = vmax.f32 %v134, 0.0
  %v142 = vmax.f32 %v137, 0.0
  %v143 = vld [vmem:[%s1] sm:$0x3]
  %vm144 = vcmask 261120
  %v146 = vsel %vm144, %v143, 0
  %148 = vmatpush.msra.mxu0 0.0
  %149 = vmatpush.msra.mxu0 0.0
  %150 = vmatpush.msra.mxu0 0.0
  %151 = vmatpush.msra.mxu0 0.0
  %152 = vmatpush.msra.mxu0 0.0
  %153 = vmatpush.msra.mxu0 0.0
  %154 = vmatpush.msra.mxu0 0.0
  %155 = vmatpush.msra.mxu0 0.0
  %156 = vmatpush.msra.mxu0 0.0
  %157 = vmatpush.msra.mxu0 0.0
  %158 = vmatpush.msra.mxu0 0.0
  %159 = vmatpush.msra.mxu0 0.0
  %160 = vmatpush.msra.mxu0 %v142
  %161 = vmatpush.msra.mxu0 %v141
  %162 = vmatpush.msra.mxu0 %v140
  %163 = vmatpush.msra.mxu0 %v139
  %164 = vmatmul.f32.gmra.mxu0 %v146
  %v165 = vpop.f32.mrf.mxu0
  %v166 = vadd.f32 0.0, %v165
  %167 = vdwg.mxu0
  %v168 = vld [vmem:[%s6] sm:$0x1]
  %v170 = vperm.slane %v168, 0
  %v172 = vmul.f32 %v166, %v170
  %vm173 = vcmask 156672
  %v174 = vsel %vm173, %v172, 0.0
  %175 = vadd.xlane.f32.xlu0 %v174
  %v176 = vpop.xlane.xlu0 %175
  %v177 = vld [vmem:[#allocation2] sm:$0x1]
  %v179 = vperm.slane %v177, 0
  %v181 = vadd.f32 %v176, %v179
  %vm182 = vcmask 1024
  %183 = vst.msk [vmem:[%s8] sm:$0x3] %vm182, %v181
  // Predicated region
  $region34: #{tpu_custom_call.1} parent=0 // pred_check
    _
  $region35: #{tpu_custom_call.1} parent=0 // pred_check_branch
    %185 = sbr.rel (0) target = $region37
  $region36: #{tpu_custom_call.1} parent=0 // pred_region
    _
  $region37: #{tpu_custom_call.1} parent=0 // pred_fallthru
    _
  // Predicated region
  $region38: #{tpu_custom_call.1} parent=0 // pred_check
    _
  $region39: #{tpu_custom_call.1} parent=0 // pred_check_branch
    %187 = sbr.rel (0) target = $region41
  $region40: #{tpu_custom_call.1} parent=0 // pred_region
    _
  $region41: #{tpu_custom_call.1} parent=0 // pred_fallthru
    _

</llo_original>
